<compile_context>
chip_gen: v7x
topology: tpu7x:2x2x1
jax: 0.10.0
libtpu: 0.0.40
codegen_flags: <defaults>
</compile_context>

<pallas_src>
import functools
import math

import jax
import jax.numpy as jnp
from jax.experimental import pallas as pl
from jax.experimental.pallas import tpu as pltpu


def _round_up(x, m):
    return (x + m - 1) // m * m


def _cdiv(a, b):
    return (a + b - 1) // b


# ------------------------------ fused kernel -------------------------------

def _mlp_fused_kernel(x_ref, *refs, n_layers, use_bf16):
    """refs = (w0, b0, w1, b1, ..., w_{L-1}, b_{L-1}, out_ref).

    Computes the full Linear(+ReLU) stack on one (tm, K0) row tile, keeping
    every intermediate activation in VMEM/registers.
    """
    o_ref = refs[-1]
    mxu_dtype = jnp.bfloat16 if use_bf16 else jnp.float32

    h = x_ref[...].astype(jnp.float32)
    for l in range(n_layers):
        w = refs[2 * l][...]          # stored bf16 (or f32) at prep time
        b = refs[2 * l + 1][...]      # f32, shape (1, n_pad)
        acc = jnp.dot(h.astype(mxu_dtype), w,
                      preferred_element_type=jnp.float32)
        h = acc + b
        if l < n_layers - 1:
            # LinearBlock activation ('relu'); the last block uses 'none'.
            h = jnp.maximum(h, 0.0)
    o_ref[...] = h.astype(o_ref.dtype)


# ------------------------- parameter pre-processing -------------------------

def prepare_mlp_params(params, *, use_bf16=True):
    """Pad each layer's output (lane) dim to a multiple of 128 with zeros and
    cast weights to bf16 (once, outside the kernel). Zero pad columns + zero
    pad bias keep the math identical to the unpadded module."""
    layers = params['layers']
    prepped = []
    kin_pad = layers[0][0].shape[0]        # input feature dim stays as-is
    for (w, b) in layers:
        kin, kout = w.shape
        kout_pad = _round_up(kout, 128)
        w_p = jnp.pad(w.astype(jnp.float32),
                      ((0, kin_pad - kin), (0, kout_pad - kout)))
        b_p = jnp.pad(b.astype(jnp.float32), ((0, 0), (0, kout_pad - kout)))
        if use_bf16:
            w_p = w_p.astype(jnp.bfloat16)
        prepped.append((w_p, b_p))
        kin_pad = kout_pad
    return prepped


# ------------------------------- wrapper -----------------------------------

def mlp_forward(x, params, *, block_m=1024, use_bf16=True,
                out_dtype=jnp.float32):
    """MLP.forward: x.view(B, -1) -> Linear/ReLU stack -> (B, output_dim)."""
    B = x.shape[0]
    x2d = jnp.reshape(x, (B, -1)).astype(jnp.float32)   # x.view(x.size(0), -1)
    M, K0 = x2d.shape

    n_out = params['layers'][-1][0].shape[1]
    prepped = prepare_mlp_params(params, use_bf16=use_bf16)
    n_layers = len(prepped)
    n_out_pad = prepped[-1][0].shape[1]                  # multiple of 128

    # Row tiling: tm is a multiple of 8 (sublane); prefer >=2 row tiles when
    # M allows so the "parallel" axis can shard across v7x's two TensorCores.
    rows8 = _round_up(M, 8)
    tm = min(block_m, rows8)
    if rows8 >= 16 and _cdiv(rows8, tm) < 2:
        tm = _round_up(_cdiv(rows8, 2), 8)
    grid_m = _cdiv(M, tm)                                # ragged last block OK

    in_specs = [pl.BlockSpec((tm, K0), lambda i: (i, 0))]
    flat_args = [x2d]
    for (w, b) in prepped:
        kin, kout = w.shape
        # Weights/biases: full-extent blocks, constant index_map -> resident
        # across all row tiles (loaded once).
        in_specs.append(pl.BlockSpec((kin, kout), lambda i: (0, 0)))
        in_specs.append(pl.BlockSpec((1, kout), lambda i: (0, 0)))
        flat_args += [w, b]

    # Explicit VMEM budget: resident (double-buffered) weights + I/O tiles,
    # clamped to a range valid on v5e/v6e (128 MiB) and v7x (64 MiB).
    w_bytes = sum(int(w.size) * w.dtype.itemsize + int(b.size) * b.dtype.itemsize
                  for w, b in prepped)
    io_bytes = tm * K0 * 4 + tm * n_out_pad * jnp.dtype(out_dtype).itemsize
    vmem_need = 2 * (w_bytes + io_bytes)
    vmem_limit = int(min(max(2 * vmem_need, 32 << 20), 64 << 20))

    out = pl.pallas_call(
        functools.partial(_mlp_fused_kernel, n_layers=n_layers,
                          use_bf16=use_bf16),
        out_shape=jax.ShapeDtypeStruct((M, n_out_pad), out_dtype),
        grid=(grid_m,),
        in_specs=in_specs,
        out_specs=pl.BlockSpec((tm, n_out_pad), lambda i: (i, 0)),
        compiler_params=pltpu.CompilerParams(
            dimension_semantics=("parallel",),
            vmem_limit_bytes=vmem_limit),
    )(*flat_args)
    return out[:M, :n_out]


def mlp_reference(x, params):
    """Pure-JAX f32 reference of MLP.forward (for the correctness check)."""
    h = jnp.reshape(x, (x.shape[0], -1)).astype(jnp.float32)
    layers = params['layers']
    for l, (w, b) in enumerate(layers):
        h = h @ w + b
        if l < len(layers) - 1:
            h = jnp.maximum(h, 0.0)
    return h


# --------------------------- parameter construction ------------------------

def init_mlp_params(key, input_dim, output_dim, dim, n_blk):
    """Deterministic nn.Linear-style init. Weights stored (in, out) so the
    kernel does x @ W directly (== PyTorch x @ weight.T)."""
    dims = [input_dim] + [dim] * (n_blk - 1) + [output_dim]   # n_blk linears
    keys = jax.random.split(key, 2 * (len(dims) - 1))
    layers = []
    for l in range(len(dims) - 1):
        fan_in, fan_out = dims[l], dims[l + 1]
        bound = 1.0 / math.sqrt(fan_in)
        w = jax.random.uniform(keys[2 * l], (fan_in, fan_out), jnp.float32,
                               -bound, bound)
        b = jax.random.uniform(keys[2 * l + 1], (1, fan_out), jnp.float32,
                               -bound, bound)
        layers.append((w, b))
    # TODO(synk): LinearBlock norm options ('bn'/'in'/'ln'/'sn') and non-ReLU
    # activations are not implemented; the MLP defaults (norm='none',
    # activ='relu') never exercise them.
    return {'layers': layers}


# ----------------------------------- main -----------------------------------

if __name__ == "__main__":
    key = jax.random.PRNGKey(0)
    k_x, k_p = jax.random.split(key)

    # MUNIT-style usage: style code of shape (B, style_dim, 1, 1); the module
    # flattens it with x.view(x.size(0), -1).
    B, style_dim = 2, 8
    dim, output_dim, n_blk = 32, 16, 3

    x = jax.random.normal(k_x, (B, style_dim, 1, 1), jnp.float32)
    params = init_mlp_params(k_p, style_dim, output_dim, dim, n_blk)

    out = mlp_forward(x, params)
    out = jax.block_until_ready(out)

    ref = mlp_reference(x, params)
    assert out.shape == (B, output_dim), out.shape
    assert bool(jnp.all(jnp.isfinite(out)))
    assert bool(jnp.allclose(out, ref, atol=5e-2, rtol=5e-2)), \
        float(jnp.max(jnp.abs(out - ref)))
    print("KERNEL_OK")
</pallas_src>

<mosaic_0001>
module attributes {stable_mosaic.version = 11 : i64} {
  func.func @_mlp_fused_kernel(%arg0: i32, %arg1: memref<8x8xf32, #tpu.memory_space<vmem>>, %arg2: memref<8x128xbf16, #tpu.memory_space<vmem>>, %arg3: memref<1x128xf32, #tpu.memory_space<vmem>>, %arg4: memref<128x128xbf16, #tpu.memory_space<vmem>>, %arg5: memref<1x128xf32, #tpu.memory_space<vmem>>, %arg6: memref<128x128xbf16, #tpu.memory_space<vmem>>, %arg7: memref<1x128xf32, #tpu.memory_space<vmem>>, %arg8: memref<8x128xf32, #tpu.memory_space<vmem>>) attributes {dimension_semantics = [#tpu.dimension_semantics<parallel>], iteration_bounds = array<i64: 1>, scalar_prefetch = 0 : i64, scratch_operands = 0 : i64, tpu.core_type = #tpu.core_type<tc>, window_params = [{transform_indices = @transform_0, window_bounds = array<i64: 8, 8>}, {pipeline_mode = #tpu.pipeline_mode<synchronous>, transform_indices = @transform_1, window_bounds = array<i64: 8, 128>}, {pipeline_mode = #tpu.pipeline_mode<synchronous>, transform_indices = @transform_2, window_bounds = array<i64: 1, 128>}, {pipeline_mode = #tpu.pipeline_mode<synchronous>, transform_indices = @transform_3, window_bounds = array<i64: 128, 128>}, {pipeline_mode = #tpu.pipeline_mode<synchronous>, transform_indices = @transform_4, window_bounds = array<i64: 1, 128>}, {pipeline_mode = #tpu.pipeline_mode<synchronous>, transform_indices = @transform_5, window_bounds = array<i64: 128, 128>}, {pipeline_mode = #tpu.pipeline_mode<synchronous>, transform_indices = @transform_6, window_bounds = array<i64: 1, 128>}, {transform_indices = @transform_7, window_bounds = array<i64: 8, 128>}]} {
    %c0 = arith.constant 0 : index
    %c0_0 = arith.constant 0 : index
    %0 = vector.load %arg1[%c0, %c0_0] : memref<8x8xf32, #tpu.memory_space<vmem>>, vector<8x8xf32>
    %c0_1 = arith.constant 0 : index
    %c0_2 = arith.constant 0 : index
    %1 = vector.load %arg2[%c0_1, %c0_2] : memref<8x128xbf16, #tpu.memory_space<vmem>>, vector<8x128xbf16>
    %c0_3 = arith.constant 0 : index
    %c0_4 = arith.constant 0 : index
    %2 = vector.load %arg3[%c0_3, %c0_4] : memref<1x128xf32, #tpu.memory_space<vmem>>, vector<1x128xf32>
    %3 = arith.truncf %0 : vector<8x8xf32> to vector<8x8xbf16>
    %cst = arith.constant dense<0.000000e+00> : vector<8x128xf32>
    %4 = tpu.matmul %3, %1, %cst {dimension_numbers = #tpu.dot_dimension_numbers<[1], [0], [0], [1], [0, 0, 1, 1], [], []>} : vector<8x8xbf16>, vector<8x128xbf16>, vector<8x128xf32> -> vector<8x128xf32>
    %5 = vector.broadcast %2 : vector<1x128xf32> to vector<8x128xf32>
    %6 = arith.addf %4, %5 : vector<8x128xf32>
    %cst_5 = arith.constant 0.000000e+00 : f32
    %7 = vector.broadcast %cst_5 : f32 to vector<8x128xf32>
    %8 = arith.maximumf %6, %7 : vector<8x128xf32>
    %c0_6 = arith.constant 0 : index
    %c0_7 = arith.constant 0 : index
    %9 = vector.load %arg4[%c0_6, %c0_7] : memref<128x128xbf16, #tpu.memory_space<vmem>>, vector<128x128xbf16>
    %c0_8 = arith.constant 0 : index
    %c0_9 = arith.constant 0 : index
    %10 = vector.load %arg5[%c0_8, %c0_9] : memref<1x128xf32, #tpu.memory_space<vmem>>, vector<1x128xf32>
    %11 = arith.truncf %8 : vector<8x128xf32> to vector<8x128xbf16>
    %cst_10 = arith.constant dense<0.000000e+00> : vector<8x128xf32>
    %12 = tpu.matmul %11, %9, %cst_10 {dimension_numbers = #tpu.dot_dimension_numbers<[1], [0], [0], [1], [0, 0, 1, 1], [], []>} : vector<8x128xbf16>, vector<128x128xbf16>, vector<8x128xf32> -> vector<8x128xf32>
    %13 = vector.broadcast %10 : vector<1x128xf32> to vector<8x128xf32>
    %14 = arith.addf %12, %13 : vector<8x128xf32>
    %cst_11 = arith.constant 0.000000e+00 : f32
    %15 = vector.broadcast %cst_11 : f32 to vector<8x128xf32>
    %16 = arith.maximumf %14, %15 : vector<8x128xf32>
    %c0_12 = arith.constant 0 : index
    %c0_13 = arith.constant 0 : index
    %17 = vector.load %arg6[%c0_12, %c0_13] : memref<128x128xbf16, #tpu.memory_space<vmem>>, vector<128x128xbf16>
    %c0_14 = arith.constant 0 : index
    %c0_15 = arith.constant 0 : index
    %18 = vector.load %arg7[%c0_14, %c0_15] : memref<1x128xf32, #tpu.memory_space<vmem>>, vector<1x128xf32>
    %19 = arith.truncf %16 : vector<8x128xf32> to vector<8x128xbf16>
    %cst_16 = arith.constant dense<0.000000e+00> : vector<8x128xf32>
    %20 = tpu.matmul %19, %17, %cst_16 {dimension_numbers = #tpu.dot_dimension_numbers<[1], [0], [0], [1], [0, 0, 1, 1], [], []>} : vector<8x128xbf16>, vector<128x128xbf16>, vector<8x128xf32> -> vector<8x128xf32>
    %21 = vector.broadcast %18 : vector<1x128xf32> to vector<8x128xf32>
    %22 = arith.addf %20, %21 : vector<8x128xf32>
    %c0_17 = arith.constant 0 : index
    %c0_18 = arith.constant 0 : index
    %23 = vector.load %arg8[%c0_17, %c0_18] : memref<8x128xf32, #tpu.memory_space<vmem>>, vector<8x128xf32>
    tpu.vector_store %arg8[%c0_17, %c0_18], %22 {strides = array<i32>} : memref<8x128xf32, #tpu.memory_space<vmem>>, vector<8x128xf32>,
    return
  }
  func.func @transform_0(%arg0: i32) -> (i32, i32) {
    %c0_i32 = arith.constant 0 : i32
    %c0_i32_0 = arith.constant 0 : i32
    return %arg0, %c0_i32 : i32, i32
  }
  func.func @transform_1(%arg0: i32) -> (i32, i32) {
    %c0_i32 = arith.constant 0 : i32
    %c0_i32_0 = arith.constant 0 : i32
    %c0_i32_1 = arith.constant 0 : i32
    return %c0_i32, %c0_i32_0 : i32, i32
  }
  func.func @transform_2(%arg0: i32) -> (i32, i32) {
    %c0_i32 = arith.constant 0 : i32
    %c0_i32_0 = arith.constant 0 : i32
    %c0_i32_1 = arith.constant 0 : i32
    return %c0_i32, %c0_i32_0 : i32, i32
  }
  func.func @transform_3(%arg0: i32) -> (i32, i32) {
    %c0_i32 = arith.constant 0 : i32
    %c0_i32_0 = arith.constant 0 : i32
    %c0_i32_1 = arith.constant 0 : i32
    return %c0_i32, %c0_i32_0 : i32, i32
  }
  func.func @transform_4(%arg0: i32) -> (i32, i32) {
    %c0_i32 = arith.constant 0 : i32
    %c0_i32_0 = arith.constant 0 : i32
    %c0_i32_1 = arith.constant 0 : i32
    return %c0_i32, %c0_i32_0 : i32, i32
  }
  func.func @transform_5(%arg0: i32) -> (i32, i32) {
    %c0_i32 = arith.constant 0 : i32
    %c0_i32_0 = arith.constant 0 : i32
    %c0_i32_1 = arith.constant 0 : i32
    return %c0_i32, %c0_i32_0 : i32, i32
  }
  func.func @transform_6(%arg0: i32) -> (i32, i32) {
    %c0_i32 = arith.constant 0 : i32
    %c0_i32_0 = arith.constant 0 : i32
    %c0_i32_1 = arith.constant 0 : i32
    return %c0_i32, %c0_i32_0 : i32, i32
  }
  func.func @transform_7(%arg0: i32) -> (i32, i32) {
    %c0_i32 = arith.constant 0 : i32
    %c0_i32_0 = arith.constant 0 : i32
    return %arg0, %c0_i32 : i32, i32
  }
}

</mosaic_0001>

<llo_original>
// kernel: tpu_custom_call.1
$region0: #{tpu_custom_call.1}
  #allocation0 [shape = 'u32[]', space=smem, size = 0x4, offset = 0x4, fixed_abs, tag = 'smem constant byte address 0x4 - core index']
  #allocation1 [shape = 'u32[144,128]{1,0:T(1,128)}', space=vmem, size = 0x12000, scoped, tag = 'internal scratch']
  %s0 = inlined_call_operand.hbm [shape: f32[2,8], index: 0, kind: input, shape index: {}]
  %s1 = inlined_call_operand.hbm [shape: bf16[8,128], index: 1, kind: input, shape index: {}]
  %s2 = inlined_call_operand.vmem [shape: f32[1,128], index: 2, kind: input, shape index: {}]
  %s3 = inlined_call_operand.hbm [shape: bf16[128,128], index: 3, kind: input, shape index: {}]
  %s4 = inlined_call_operand.vmem [shape: f32[1,128], index: 4, kind: input, shape index: {}]
  %s5 = inlined_call_operand.hbm [shape: bf16[128,128], index: 5, kind: input, shape index: {}]
  %s6 = inlined_call_operand.vmem [shape: f32[1,128], index: 6, kind: input, shape index: {}]
  %s7 = inlined_call_operand.hbm [shape: f32[2,128], index: 7, kind: output, shape index: {}]
  %s8 = sld [smem:[#allocation0]]
  $region54: #{tpu_custom_call.1} parent=0
    _
  %s10 = ssub.s32 1, %s8
  %s11 = scalar_select 0, %s10, %s8
  $region1: #{tpu_custom_call.1} parent=0
    #allocation2 [shape = 'u8[4096]{0}', space=vmem, size = 0x1000, scoped, tag = 'input window, operand 0, single buffered']
    #allocation3 [shape = 's32[1]{0}', space=sflag, size = 0x4, scoped, tag = 'scoped memory for tpu_custom_call.1']
    #allocation4 [shape = 's32[1]{0}', space=sflag, size = 0x4, scoped, tag = 'scoped memory for tpu_custom_call.1']
    #allocation5 [shape = 'u8[2048]{0}', space=vmem, size = 0x800, scoped, tag = 'input window, operand 1, single buffered']
    #allocation6 [shape = 's32[1]{0}', space=sflag, size = 0x4, scoped, tag = 'scoped memory for tpu_custom_call.1']
    #allocation7 [shape = 'u8[32768]{0}', space=vmem, size = 0x8000, scoped, tag = 'input window, operand 3, single buffered']
    #allocation8 [shape = 'u8[32768]{0}', space=vmem, size = 0x8000, scoped, tag = 'input window, operand 5, single buffered']
    #allocation9 [shape = 's32[1]{0}', space=sflag, size = 0x4, scoped, tag = 'scoped memory for tpu_custom_call.1']
    #allocation10 [shape = 'u8[4096]{0}', space=vmem, size = 0x1000, scoped, tag = 'output window, operand 0, single buffered']
    %12 = vsyncpa [#allocation3], 0
    %13 = vsyncpa [#allocation6], 0
    %14 = vsyncpa [#allocation9], 0
    %15 = vsyncpa [#allocation4], 0
    // Predicated region
    $region2: #{tpu_custom_call.1} parent=1 // pred_check
      _
    $region3: #{tpu_custom_call.1} parent=1 // pred_check_branch
      %17 = sbr.rel (0) target = $region5
    $region4: #{tpu_custom_call.1} parent=1 // pred_region
      %s19 = ssub.s32 128, 32
      %20 = vsyncadd [#allocation3], %s19
      %s21 = sshll.u32 [#allocation2], 4
      %s22 = int_to_ptr.vmem [resolvable:$true] %s21
      %27 = dma.hbm_to_vmem [thread:$0]  %s0, 32, %s22, [#allocation3], 32, 32, 2
    $region5: #{tpu_custom_call.1} parent=1 // pred_fallthru
      _
    // Predicated region
    $region6: #{tpu_custom_call.1} parent=1 // pred_check
      _
    $region7: #{tpu_custom_call.1} parent=1 // pred_check_branch
      %29 = sbr.rel (0) target = $region9
    $region8: #{tpu_custom_call.1} parent=1 // pred_region
      %s31 = ssub.s32 64, 64
      %32 = vsyncadd [#allocation6], %s31
      %s34 = sshll.u32 [#allocation5], 4
      %s35 = int_to_ptr.vmem [resolvable:$true] %s34
      %37 = dma.hbm_to_vmem [thread:$0]  %s1, 64, %s35, [#allocation6]
    $region9: #{tpu_custom_call.1} parent=1 // pred_fallthru
      _
    // Predicated region
    $region10: #{tpu_custom_call.1} parent=1 // pred_check
      _
    $region11: #{tpu_custom_call.1} parent=1 // pred_check_branch
      %39 = sbr.rel (0) target = $region13
    $region12: #{tpu_custom_call.1} parent=1 // pred_region
      _
    $region13: #{tpu_custom_call.1} parent=1 // pred_fallthru
      _
    // Predicated region
    $region14: #{tpu_custom_call.1} parent=1 // pred_check
      _
    $region15: #{tpu_custom_call.1} parent=1 // pred_check_branch
      %41 = sbr.rel (0) target = $region17
    $region16: #{tpu_custom_call.1} parent=1 // pred_region
      %s43 = ssub.s32 1024, 1024
      %44 = vsyncadd [#allocation6], %s43
      %s45 = sshll.u32 [#allocation7], 4
      %s46 = int_to_ptr.vmem [resolvable:$true] %s45
      %51 = dma.hbm_to_vmem [thread:$0]  %s3, 1024, %s46, [#allocation6], 64, 64, 4
    $region17: #{tpu_custom_call.1} parent=1 // pred_fallthru
      _
    // Predicated region
    $region18: #{tpu_custom_call.1} parent=1 // pred_check
      _
    $region19: #{tpu_custom_call.1} parent=1 // pred_check_branch
      %53 = sbr.rel (0) target = $region21
    $region20: #{tpu_custom_call.1} parent=1 // pred_region
      _
    $region21: #{tpu_custom_call.1} parent=1 // pred_fallthru
      _
    // Predicated region
    $region22: #{tpu_custom_call.1} parent=1 // pred_check
      _
    $region23: #{tpu_custom_call.1} parent=1 // pred_check_branch
      %55 = sbr.rel (0) target = $region25
    $region24: #{tpu_custom_call.1} parent=1 // pred_region
      %s57 = ssub.s32 1024, 1024
      %58 = vsyncadd [#allocation9], %s57
      %s59 = sshll.u32 [#allocation8], 4
      %s60 = int_to_ptr.vmem [resolvable:$true] %s59
      %65 = dma.hbm_to_vmem [thread:$0]  %s5, 1024, %s60, [#allocation9], 64, 64, 4
    $region25: #{tpu_custom_call.1} parent=1 // pred_fallthru
      _
    // Predicated region
    $region26: #{tpu_custom_call.1} parent=1 // pred_check
      _
    $region27: #{tpu_custom_call.1} parent=1 // pred_check_branch
      %67 = sbr.rel (0) target = $region29
    $region28: #{tpu_custom_call.1} parent=1 // pred_region
      _
    $region29: #{tpu_custom_call.1} parent=1 // pred_fallthru
      _
    // Predicated region
    $region30: #{tpu_custom_call.1} parent=1 // pred_check
      _
    $region31: #{tpu_custom_call.1} parent=1 // pred_check_branch
      %69 = sbr.rel (0) target = $region33
    $region32: #{tpu_custom_call.1} parent=1 // pred_region
      %70 = dma.done [#allocation3], 128
    $region33: #{tpu_custom_call.1} parent=1 // pred_fallthru
      _
    // Predicated region
    $region34: #{tpu_custom_call.1} parent=1 // pred_check
      _
    $region35: #{tpu_custom_call.1} parent=1 // pred_check_branch
      %72 = sbr.rel (0) target = $region37
    $region36: #{tpu_custom_call.1} parent=1 // pred_region
      %73 = dma.done [#allocation6], 64
    $region37: #{tpu_custom_call.1} parent=1 // pred_fallthru
      _
    // Predicated region
    $region38: #{tpu_custom_call.1} parent=1 // pred_check
      _
    $region39: #{tpu_custom_call.1} parent=1 // pred_check_branch
      %75 = sbr.rel (0) target = $region41
    $region40: #{tpu_custom_call.1} parent=1 // pred_region
      %76 = dma.done [#allocation6], 1024
    $region41: #{tpu_custom_call.1} parent=1 // pred_fallthru
      _
    // Predicated region
    $region42: #{tpu_custom_call.1} parent=1 // pred_check
      _
    $region43: #{tpu_custom_call.1} parent=1 // pred_check_branch
      %78 = sbr.rel (0) target = $region45
    $region44: #{tpu_custom_call.1} parent=1 // pred_region
      %79 = dma.done [#allocation9], 1024
    $region45: #{tpu_custom_call.1} parent=1 // pred_fallthru
      _
    %v81 = vld [vmem:[#allocation2] sm:$0xff]
    %v82 = vld [vmem:[#allocation5] sm:$0xf]
    %v83 = vld [vmem:[%s2] sm:$0x1]
    %v84 = vpack.c.bf16 %v81, %v81
    %v86 = vlaneseq
    %v87 = vshrl.u32 %v86, 7
    %v88 = vsub.s32 0, %v87
    %v89 = vrot.slane %v83, %v88
    %vm91 = vcmask 64512
    %v93 = vsel %vm91, %v84, 0
    %vm95 = vcmask 1043456
    %v97 = vsel %vm95, %v82, 0
    %99 = vmatprep.subr.bf16.mxu0 0
    %100 = vmatpush1.bf16.msra.mxu0 %v97
    %101 = vmatprep.subr.bf16.mxu0 0
    %102 = vmatpush1.bf16.msra.mxu0 0
    %103 = vmatprep.subr.bf16.mxu0 0
    %104 = vmatpush1.bf16.msra.mxu0 0
    %105 = vmatprep.subr.bf16.mxu0 0
    %106 = vmatpush1.bf16.msra.mxu0 0
    %107 = vmatprep.subr.bf16.mxu0 0
    %108 = vmatpush1.bf16.msra.mxu0 0
    %109 = vmatprep.subr.bf16.mxu0 0
    %110 = vmatpush1.bf16.msra.mxu0 0
    %111 = vmatprep.subr.bf16.mxu0 0
    %112 = vmatpush1.bf16.msra.mxu0 0
    %113 = vmatprep.subr.bf16.mxu0 0
    %114 = vmatpush1.bf16.msra.mxu0 0
    %115 = vmatprep.subr.bf16.mxu0 0
    %116 = vmatpush1.bf16.msra.mxu0 0
    %117 = vmatprep.subr.bf16.mxu0 0
    %118 = vmatpush1.bf16.msra.mxu0 0
    %119 = vmatprep.subr.bf16.mxu0 0
    %120 = vmatpush1.bf16.msra.mxu0 0
    %121 = vmatprep.subr.bf16.mxu0 0
    %122 = vmatpush1.bf16.msra.mxu0 0
    %123 = vmatprep.subr.bf16.mxu0 0
    %124 = vmatpush1.bf16.msra.mxu0 0
    %125 = vmatprep.subr.bf16.mxu0 0
    %126 = vmatpush1.bf16.msra.mxu0 0
    %127 = vmatprep.subr.bf16.mxu0 0
    %128 = vmatpush1.bf16.msra.mxu0 0
    %129 = vmatprep.subr.bf16.mxu0 0
    %130 = vmatpush1.bf16.msra.mxu0 0
    %131 = vmatprep.mubr.bf16.mxu0 0
    %132 = vmatmul.mubr.bf16.gmra.mrb[0].mxu0 %v93
    %v133 = vpop.f32.mrb[0].mxu0
    %v134 = vadd.f32 %v89, %v133
    %v135 = vpop.f32.mrb[0].mxu0
    %v136 = vpop.f32.mrb[0].mxu0
    %v137 = vpop.f32.mrb[0].mxu0
    %138 = vdwg.mxu0
    %v139 = vmax.f32 %v134, 0.0
    %v140 = vld [vmem:[#allocation7] sm:$0xf]
    %v141 = vld [vmem:[#allocation7 + $0x4] sm:$0xf]
    %v142 = vld [vmem:[#allocation7 + $0x8] sm:$0xf]
    %v143 = vld [vmem:[#allocation7 + $0xc] sm:$0xf]
    %v144 = vld [vmem:[#allocation7 + $0x10] sm:$0xf]
    %v145 = vld [vmem:[#allocation7 + $0x14] sm:$0xf]
    %v146 = vld [vmem:[#allocation7 + $0x18] sm:$0xf]
    %v147 = vld [vmem:[#allocation7 + $0x1c] sm:$0xf]
    %v148 = vld [vmem:[#allocation7 + $0x20] sm:$0xf]
    %v149 = vld [vmem:[#allocation7 + $0x24] sm:$0xf]
    %v150 = vld [vmem:[#allocation7 + $0x28] sm:$0xf]
    %v151 = vld [vmem:[#allocation7 + $0x2c] sm:$0xf]
    %v152 = vld [vmem:[#allocation7 + $0x30] sm:$0xf]
    %v153 = vld [vmem:[#allocation7 + $0x34] sm:$0xf]
    %v154 = vld [vmem:[#allocation7 + $0x38] sm:$0xf]
    %v155 = vld [vmem:[#allocation7 + $0x3c] sm:$0xf]
    %v156 = vld [vmem:[%s4] sm:$0x1]
    %v157 = vpack.c.bf16 %v139, %v139
    %v159 = vlaneseq
    %v160 = vshrl.u32 %v159, 7
    %v161 = vsub.s32 0, %v160
    %v162 = vrot.slane %v156, %v161
    %v180 = vunpack.c.l.b16 %v140
    %v181 = vunpack.c.l.b16 %v141
    %v182 = vunpack.c.l.b16 %v142
    %v183 = vunpack.c.l.b16 %v143
    %v184 = vunpack.c.l.b16 %v144
    %v185 = vunpack.c.l.b16 %v145
    %v186 = vunpack.c.l.b16 %v146
    %v187 = vunpack.c.l.b16 %v147
    %v188 = vunpack.c.l.b16 %v148
    %v189 = vunpack.c.l.b16 %v149
    %v190 = vunpack.c.l.b16 %v150
    %v191 = vunpack.c.l.b16 %v151
    %v192 = vunpack.c.l.b16 %v152
    %v193 = vunpack.c.l.b16 %v153
    %v194 = vunpack.c.l.b16 %v154
    %v195 = vunpack.c.l.b16 %v155
    %v196 = vpack.c.b16 %v181, %v180
    %v197 = vpack.c.b16 %v183, %v182
    %v198 = vpack.c.b16 %v185, %v184
    %v199 = vpack.c.b16 %v187, %v186
    %v200 = vpack.c.b16 %v189, %v188
    %v201 = vpack.c.b16 %v191, %v190
    %v202 = vpack.c.b16 %v193, %v192
    %v203 = vpack.c.b16 %v195, %v194
    %212 = vmatprep.subr.bf16.mxu0 0
    %213 = vmatpush1.bf16.msra.mxu0 %v196
    %214 = vmatprep.subr.bf16.mxu0 0
    %215 = vmatpush1.bf16.msra.mxu0 %v197
    %216 = vmatprep.subr.bf16.mxu0 0
    %217 = vmatpush1.bf16.msra.mxu0 %v198
    %218 = vmatprep.subr.bf16.mxu0 0
    %219 = vmatpush1.bf16.msra.mxu0 %v199
    %220 = vmatprep.subr.bf16.mxu0 0
    %221 = vmatpush1.bf16.msra.mxu0 %v200
    %222 = vmatprep.subr.bf16.mxu0 0
    %223 = vmatpush1.bf16.msra.mxu0 %v201
    %224 = vmatprep.subr.bf16.mxu0 0
    %225 = vmatpush1.bf16.msra.mxu0 %v202
    %226 = vmatprep.subr.bf16.mxu0 0
    %227 = vmatpush1.bf16.msra.mxu0 %v203
    %228 = vmatprep.subr.bf16.mxu0 0
    %229 = vmatpush1.bf16.msra.mxu0 0
    %230 = vmatprep.subr.bf16.mxu0 0
    %231 = vmatpush1.bf16.msra.mxu0 0
    %232 = vmatprep.subr.bf16.mxu0 0
    %233 = vmatpush1.bf16.msra.mxu0 0
    %234 = vmatprep.subr.bf16.mxu0 0
    %235 = vmatpush1.bf16.msra.mxu0 0
    %236 = vmatprep.subr.bf16.mxu0 0
    %237 = vmatpush1.bf16.msra.mxu0 0
    %238 = vmatprep.subr.bf16.mxu0 0
    %239 = vmatpush1.bf16.msra.mxu0 0
    %240 = vmatprep.subr.bf16.mxu0 0
    %241 = vmatpush1.bf16.msra.mxu0 0
    %242 = vmatprep.subr.bf16.mxu0 0
    %243 = vmatpush1.bf16.msra.mxu0 0
    %244 = vmatprep.mubr.bf16.mxu0 0
    %245 = vmatmul.mubr.bf16.gmra.mrb[0].mxu0 %v157
    %v246 = vpop.f32.mrb[0].mxu0
    %v247 = vadd.f32 %v162, %v246
    %v248 = vpop.f32.mrb[0].mxu0
    %v249 = vpop.f32.mrb[0].mxu0
    %v250 = vpop.f32.mrb[0].mxu0
    %251 = vdwg.mxu0
    %v252 = vmax.f32 %v247, 0.0
    %v253 = vld [vmem:[#allocation8] sm:$0xf]
    %v254 = vld [vmem:[#allocation8 + $0x4] sm:$0xf]
    %v255 = vld [vmem:[#allocation8 + $0x8] sm:$0xf]
    %v256 = vld [vmem:[#allocation8 + $0xc] sm:$0xf]
    %v257 = vld [vmem:[#allocation8 + $0x10] sm:$0xf]
    %v258 = vld [vmem:[#allocation8 + $0x14] sm:$0xf]
    %v259 = vld [vmem:[#allocation8 + $0x18] sm:$0xf]
    %v260 = vld [vmem:[#allocation8 + $0x1c] sm:$0xf]
    %v261 = vld [vmem:[#allocation8 + $0x20] sm:$0xf]
    %v262 = vld [vmem:[#allocation8 + $0x24] sm:$0xf]
    %v263 = vld [vmem:[#allocation8 + $0x28] sm:$0xf]
    %v264 = vld [vmem:[#allocation8 + $0x2c] sm:$0xf]
    %v265 = vld [vmem:[#allocation8 + $0x30] sm:$0xf]
    %v266 = vld [vmem:[#allocation8 + $0x34] sm:$0xf]
    %v267 = vld [vmem:[#allocation8 + $0x38] sm:$0xf]
    %v268 = vld [vmem:[#allocation8 + $0x3c] sm:$0xf]
    %v269 = vld [vmem:[%s6] sm:$0x1]
    %v270 = vpack.c.bf16 %v252, %v252
    %v272 = vlaneseq
    %v273 = vshrl.u32 %v272, 7
    %v274 = vsub.s32 0, %v273
    %v275 = vrot.slane %v269, %v274
    %v293 = vunpack.c.l.b16 %v253
    %v294 = vunpack.c.l.b16 %v254
    %v295 = vunpack.c.l.b16 %v255
    %v296 = vunpack.c.l.b16 %v256
    %v297 = vunpack.c.l.b16 %v257
    %v298 = vunpack.c.l.b16 %v258
    %v299 = vunpack.c.l.b16 %v259
    %v300 = vunpack.c.l.b16 %v260
    %v301 = vunpack.c.l.b16 %v261
    %v302 = vunpack.c.l.b16 %v262
    %v303 = vunpack.c.l.b16 %v263
    %v304 = vunpack.c.l.b16 %v264
    %v305 = vunpack.c.l.b16 %v265
    %v306 = vunpack.c.l.b16 %v266
    %v307 = vunpack.c.l.b16 %v267
    %v308 = vunpack.c.l.b16 %v268
    %v309 = vpack.c.b16 %v294, %v293
    %v310 = vpack.c.b16 %v296, %v295
    %v311 = vpack.c.b16 %v298, %v297
    %v312 = vpack.c.b16 %v300, %v299
    %v313 = vpack.c.b16 %v302, %v301
    %v314 = vpack.c.b16 %v304, %v303
    %v315 = vpack.c.b16 %v306, %v305
    %v316 = vpack.c.b16 %v308, %v307
    %325 = vmatprep.subr.bf16.mxu0 0
    %326 = vmatpush1.bf16.msra.mxu0 %v309
    %327 = vmatprep.subr.bf16.mxu0 0
    %328 = vmatpush1.bf16.msra.mxu0 %v310
    %329 = vmatprep.subr.bf16.mxu0 0
    %330 = vmatpush1.bf16.msra.mxu0 %v311
    %331 = vmatprep.subr.bf16.mxu0 0
    %332 = vmatpush1.bf16.msra.mxu0 %v312
    %333 = vmatprep.subr.bf16.mxu0 0
    %334 = vmatpush1.bf16.msra.mxu0 %v313
    %335 = vmatprep.subr.bf16.mxu0 0
    %336 = vmatpush1.bf16.msra.mxu0 %v314
    %337 = vmatprep.subr.bf16.mxu0 0
    %338 = vmatpush1.bf16.msra.mxu0 %v315
    %339 = vmatprep.subr.bf16.mxu0 0
    %340 = vmatpush1.bf16.msra.mxu0 %v316
    %341 = vmatprep.subr.bf16.mxu0 0
    %342 = vmatpush1.bf16.msra.mxu0 0
    %343 = vmatprep.subr.bf16.mxu0 0
    %344 = vmatpush1.bf16.msra.mxu0 0
    %345 = vmatprep.subr.bf16.mxu0 0
    %346 = vmatpush1.bf16.msra.mxu0 0
    %347 = vmatprep.subr.bf16.mxu0 0
    %348 = vmatpush1.bf16.msra.mxu0 0
    %349 = vmatprep.subr.bf16.mxu0 0
    %350 = vmatpush1.bf16.msra.mxu0 0
    %351 = vmatprep.subr.bf16.mxu0 0
    %352 = vmatpush1.bf16.msra.mxu0 0
    %353 = vmatprep.subr.bf16.mxu0 0
    %354 = vmatpush1.bf16.msra.mxu0 0
    %355 = vmatprep.subr.bf16.mxu0 0
    %356 = vmatpush1.bf16.msra.mxu0 0
    %357 = vmatprep.mubr.bf16.mxu0 0
    %358 = vmatmul.mubr.bf16.gmra.mrb[0].mxu0 %v270
    %v359 = vpop.f32.mrb[0].mxu0
    %v360 = vadd.f32 %v275, %v359
    %v361 = vpop.f32.mrb[0].mxu0
    %v362 = vpop.f32.mrb[0].mxu0
    %v363 = vpop.f32.mrb[0].mxu0
    %364 = vdwg.mxu0
    %365 = vst [vmem:[#allocation10] sm:$0xff] %v360
    // Predicated region
    $region46: #{tpu_custom_call.1} parent=1 // pred_check
      _
    $region47: #{tpu_custom_call.1} parent=1 // pred_check_branch
      %367 = sbr.rel (0) target = $region49
    $region48: #{tpu_custom_call.1} parent=1 // pred_region
      %s369 = ssub.s32 128, 32
      %370 = vsyncadd [#allocation4], %s369
      %s371 = sshll.u32 [#allocation10], 4
      %s372 = int_to_ptr.vmem [resolvable:$true] %s371
      %377 = dma.vmem_to_hbm [thread:$0]  %s372, 32, %s7, [#allocation4], 32, 32, 2
    $region49: #{tpu_custom_call.1} parent=1 // pred_fallthru
      _
    // Predicated region
    $region50: #{tpu_custom_call.1} parent=1 // pred_check
      _
    $region51: #{tpu_custom_call.1} parent=1 // pred_check_branch
      %379 = sbr.rel (0) target = $region53
    $region52: #{tpu_custom_call.1} parent=1 // pred_region
      %380 = dma.done [#allocation4], 128
    $region53: #{tpu_custom_call.1} parent=1 // pred_fallthru
      _
    %381 = vsyncpa [#allocation3], 1
    %382 = vsyncpa [#allocation6], 1
    %383 = vsyncpa [#allocation9], 1
    %384 = vsyncpa [#allocation4], 1

</llo_original>
